<compile_context>
chip_gen: v5e
topology: v5e:2x2
jax: 0.10.0
libtpu: 0.0.40
codegen_flags: <defaults>
</compile_context>

<pallas_src>
from collections import OrderedDict
from functools import partial

import jax
import jax.numpy as jnp
from jax.experimental import pallas as pl
from jax.experimental.pallas import tpu as pltpu

_LANE = 128
_SUBLANE = 8
_MAX_TILE_M = 512   # max batch-tile rows
_MAX_TILE_D = 512   # max output-tile lanes


def _cumulative_sum(xs):
    out = [0]
    for x in xs:
        out.append(out[-1] + x)
    return out


def _round_up(x, m):
    return ((x + m - 1) // m) * m


def _cdiv(a, b):
    return -(-a // b)


# ---------------------------------------------------------------------------
# Pallas kernel: fused block-diagonal 2-layer MLP over one (batch, D) tile.
# ---------------------------------------------------------------------------
def _compound_decoder_kernel(z_ref, w1_ref, b1_ref, w2_ref, b2_ref, o_ref):
    # z arrives as f32 straight from HBM (no wrapper-side pad/cast pass);
    # cast to bf16 on the VPU so both matmuls run as native bf16 on the MXU.
    z = z_ref[...].astype(jnp.bfloat16)
    # (tile_m, L) @ (L, H) -> f32 accumulation on the MXU (short K is fine).
    h = jnp.dot(z, w1_ref[...], preferred_element_type=jnp.float32)
    # Bias + tanh stay in f32 (EUP slot; v5e has no bf16 elementwise path).
    h = jnp.tanh(h + b1_ref[...])
    # Second matmul: cast activation to bf16 for native MXU throughput.
    o = jnp.dot(h.astype(jnp.bfloat16), w2_ref[...],
                preferred_element_type=jnp.float32)
    o_ref[...] = (o + b2_ref[...]).astype(o_ref.dtype)


def _spec(shape, index_map, mode):
    if mode is None:
        return pl.BlockSpec(shape, index_map)
    return pl.BlockSpec(shape, index_map, pipeline_mode=mode)


def _fused_decode(z_pad, w1, b1, w2, b2, *, tile_m, single_buffer_weights):
    """One pallas_call for ALL keys: (batch, D)-tiled grid, resident weights."""
    b_pad, l_tot = z_pad.shape
    h_pad = w1.shape[1]
    d_pad = w2.shape[1]
    grid_m = b_pad // tile_m

    # D tile: largest multiple of 128 that divides d_pad and is <= _MAX_TILE_D.
    d_units = d_pad // _LANE
    max_units = _MAX_TILE_D // _LANE
    t_units = max(u for u in range(1, min(d_units, max_units) + 1)
                  if d_units % u == 0)
    tile_d = t_units * _LANE
    grid_d = d_pad // tile_d

    # Constant-index blocks are DMA'd once and stay resident -> single buffer.
    # Blocks that move with a grid axis keep default double-buffering.
    resident = pl.Buffered(1) if single_buffer_weights else None
    w2_mode = resident if grid_d == 1 else None

    # Explicit VMEM budget (bytes actually needed, 1.5x margin + 4 MiB).
    n_w1 = 1 if single_buffer_weights else 2
    n_w2 = 1 if w2_mode is not None else 2
    est = (2 * tile_m * _round_up(l_tot, _LANE) * 4          # z tiles (f32)
           + n_w1 * _round_up(l_tot, _SUBLANE) * h_pad * 2   # W1 (bf16)
           + n_w1 * _SUBLANE * h_pad * 4                     # b1 (f32)
           + n_w2 * h_pad * tile_d * 2                       # W2 (bf16)
           + n_w2 * _SUBLANE * tile_d * 4                    # b2 (f32)
           + 2 * tile_m * tile_d * 4                         # out tiles (f32)
           + 2 * tile_m * h_pad * 4)                         # hidden scratch
    vmem_bytes = min(max(int(1.5 * est) + (4 << 20), 32 << 20), 64 << 20)

    return pl.pallas_call(
        _compound_decoder_kernel,
        out_shape=jax.ShapeDtypeStruct((b_pad, d_pad), jnp.float32),
        grid_spec=pltpu.PrefetchScalarGridSpec(
            num_scalar_prefetch=0,
            grid=(grid_m, grid_d),
            in_specs=[
                # z tile moves with the batch axis only (no lane padding).
                _spec((tile_m, l_tot), lambda i, j: (i, 0), None),
                # Layer-1 weights/bias: constant index -> loaded once, resident.
                _spec((l_tot, h_pad), lambda i, j: (0, 0), resident),
                _spec((1, h_pad), lambda i, j: (0, 0), resident),
                # Layer-2 weights/bias move with the D axis.
                _spec((h_pad, tile_d), lambda i, j: (0, j), w2_mode),
                _spec((1, tile_d), lambda i, j: (0, j), w2_mode),
            ],
            out_specs=pl.BlockSpec((tile_m, tile_d), lambda i, j: (i, j)),
        ),
        compiler_params=pltpu.CompilerParams(
            # (batch, D) tiles are independent -> shard across v7x's two TCs.
            dimension_semantics=("parallel", "parallel"),
            vmem_limit_bytes=vmem_bytes,
        ),
    )(z_pad, w1, b1, w2, b2)


# ---------------------------------------------------------------------------
# Compound decoder wrapper: pack block-diagonal weights once, fuse per call.
# ---------------------------------------------------------------------------
class CompoundDecoder:
    def __init__(self, params: "OrderedDict[str, dict]", latent_sizes):
        # params[key] = {"w1": (L_i, H_i), "b1": (1, H_i),
        #                "w2": (H_i, D_i), "b2": (1, D_i)}
        self.keys = list(params.keys())
        self.latent_sizes = list(latent_sizes)
        self.offsets = _cumulative_sum(self.latent_sizes)       # latent offsets
        hidden_sizes = [params[k]["w1"].shape[1] for k in self.keys]
        out_sizes = [params[k]["w2"].shape[1] for k in self.keys]
        self.out_sizes = out_sizes
        self._h_off = _cumulative_sum(hidden_sizes)
        self._d_off = _cumulative_sum(out_sizes)

        l_tot, h_tot, d_tot = self.offsets[-1], self._h_off[-1], self._d_off[-1]
        # z keeps its true width; only H / D lanes are padded to 128 so the
        # hidden activation and output stores stay lane-dense (unmasked vst).
        self._l_tot = l_tot
        self._h_pad = _round_up(max(h_tot, 1), _LANE)
        self._d_pad = _round_up(max(d_tot, 1), _LANE)

        # Block-diagonal packing (zero padding is exact: padded hidden columns
        # are tanh(0 + 0) = 0 and meet zero W2 rows; padded output columns are
        # sliced away in the wrapper).
        w1 = jnp.zeros((l_tot, self._h_pad), jnp.float32)
        b1 = jnp.zeros((1, self._h_pad), jnp.float32)
        w2 = jnp.zeros((self._h_pad, self._d_pad), jnp.float32)
        b2 = jnp.zeros((1, self._d_pad), jnp.float32)
        for i, k in enumerate(self.keys):
            p = params[k]
            lo, hi = self.offsets[i], self.offsets[i + 1]
            ho, hh = self._h_off[i], self._h_off[i + 1]
            do, dh = self._d_off[i], self._d_off[i + 1]
            w1 = w1.at[lo:hi, ho:hh].set(p["w1"])
            b1 = b1.at[:, ho:hh].set(p["b1"])
            w2 = w2.at[ho:hh, do:dh].set(p["w2"])
            b2 = b2.at[:, do:dh].set(p["b2"])

        # bf16 MXU operands; biases stay f32 (f32 accumulation path).
        self._w1 = w1.astype(jnp.bfloat16)
        self._w2 = w2.astype(jnp.bfloat16)
        self._b1 = b1
        self._b2 = b2
        self._decode = None

    # Whole forward (pad + kernel + per-key slices) traced as one jit.
    def _forward(self, z, *, single_buffer_weights):
        b, l = z.shape
        if l != self._l_tot:
            raise ValueError(f"expected latent width {self._l_tot}, got {l}")

        # Balanced batch tiles: over-padding bounded by <8 rows per tile.
        n_tiles = max(1, _cdiv(b, _MAX_TILE_M))
        if b > 256 and n_tiles < 2:
            n_tiles = 2                      # v7x: keep both TensorCores busy
        tile_m = _round_up(_cdiv(b, n_tiles), _SUBLANE)
        b_pad = tile_m * n_tiles
        z_pad = jnp.pad(z, ((0, b_pad - b), (0, 0)))

        out_full = _fused_decode(z_pad, self._w1, self._b1, self._w2, self._b2,
                                 tile_m=tile_m,
                                 single_buffer_weights=single_buffer_weights)

        out = OrderedDict()
        for i, k in enumerate(self.keys):
            out[k] = out_full[:b, self._d_off[i]:self._d_off[i + 1]]
        return out

    def __call__(self, z):
        if z.ndim != 2:
            raise TypeError(f"expected 2D tensor, got shape {z.shape}")
        if self._decode is None:
            # Prefer single-buffered resident weights (halves their VMEM);
            # fall back to default double-buffering if this Pallas build
            # rejects pipeline_mode=pl.Buffered(1).
            try:
                fn = jax.jit(partial(self._forward, single_buffer_weights=True))
                out = fn(z)
                jax.tree_util.tree_map(jax.block_until_ready, out)
                self._decode = fn
                return out
            except Exception:
                self._decode = jax.jit(
                    partial(self._forward, single_buffer_weights=False))
        return self._decode(z)


# ---------------------------------------------------------------------------
# Pure-JAX f32 reference for correctness checking.
# ---------------------------------------------------------------------------
def _ref_decode(z, params, offsets):
    out = {}
    for i, (key, p) in enumerate(params.items()):
        zs = z[:, offsets[i]:offsets[i + 1]]
        h = jnp.tanh(zs @ p["w1"] + p["b1"])
        out[key] = h @ p["w2"] + p["b2"]
    return out


if __name__ == "__main__":
    key = jax.random.PRNGKey(0)

    batch = 2
    hidden = 32
    # Two sub-decoders ("a", "b") with latent sizes [8, 8] -> total latent 16.
    latent_sizes = [8, 8]
    out_dims = OrderedDict([("a", 16), ("b", 24)])

    # Deterministic synthetic parameters (no checkpoint loading).
    params = OrderedDict()
    k = key
    for name, (lsz, odim) in zip(out_dims.keys(),
                                 zip(latent_sizes, out_dims.values())):
        k, k1, k2, k3, k4 = jax.random.split(k, 5)
        params[name] = {
            "w1": jax.random.normal(k1, (lsz, hidden), jnp.float32) * 0.1,
            "b1": jax.random.normal(k2, (1, hidden), jnp.float32) * 0.1,
            "w2": jax.random.normal(k3, (hidden, odim), jnp.float32) * 0.1,
            "b2": jax.random.normal(k4, (1, odim), jnp.float32) * 0.1,
        }

    k, kz = jax.random.split(k)
    z = jax.random.normal(kz, (batch, sum(latent_sizes)), jnp.float32)

    decoder = CompoundDecoder(params, latent_sizes)
    out = decoder(z)
    out = jax.tree_util.tree_map(jax.block_until_ready, out)

    # Reference is pure f32; kernel uses bf16 MXU operands -> loose tolerance.
    ref = _ref_decode(z, params, decoder.offsets)
    for name in out_dims:
        assert out[name].shape == (batch, out_dims[name]), (name, out[name].shape)
        err = float(jnp.max(jnp.abs(out[name] - ref[name])))
        assert err < 3e-2, f"mismatch for {name}: {err}"

    # TODO(synk): get_tracer()/TensorCollection are host-side bookkeeping with
    # no Pallas equivalent; a plain OrderedDict of arrays is returned instead.
    print("KERNEL_OK")
</pallas_src>

<mosaic_0001>
module attributes {stable_mosaic.version = 11 : i64} {
  func.func @_compound_decoder_kernel(%arg0: i32, %arg1: i32, %arg2: memref<8x16xf32, #tpu.memory_space<vmem>>, %arg3: memref<16x128xbf16, #tpu.memory_space<vmem>>, %arg4: memref<1x128xf32, #tpu.memory_space<vmem>>, %arg5: memref<128x128xbf16, #tpu.memory_space<vmem>>, %arg6: memref<1x128xf32, #tpu.memory_space<vmem>>, %arg7: memref<8x128xf32, #tpu.memory_space<vmem>>) attributes {dimension_semantics = [#tpu.dimension_semantics<parallel>, #tpu.dimension_semantics<parallel>], iteration_bounds = array<i64: 1, 1>, scalar_prefetch = 0 : i64, scratch_operands = 0 : i64, tpu.core_type = #tpu.core_type<tc>, window_params = [{transform_indices = @transform_0, window_bounds = array<i64: 8, 16>}, {pipeline_mode = #tpu.pipeline_mode<synchronous>, transform_indices = @transform_1, window_bounds = array<i64: 16, 128>}, {pipeline_mode = #tpu.pipeline_mode<synchronous>, transform_indices = @transform_2, window_bounds = array<i64: 1, 128>}, {pipeline_mode = #tpu.pipeline_mode<synchronous>, transform_indices = @transform_3, window_bounds = array<i64: 128, 128>}, {pipeline_mode = #tpu.pipeline_mode<synchronous>, transform_indices = @transform_4, window_bounds = array<i64: 1, 128>}, {transform_indices = @transform_5, window_bounds = array<i64: 8, 128>}]} {
    %c0 = arith.constant 0 : index
    %c0_0 = arith.constant 0 : index
    %0 = vector.load %arg2[%c0, %c0_0] : memref<8x16xf32, #tpu.memory_space<vmem>>, vector<8x16xf32>
    %1 = arith.truncf %0 : vector<8x16xf32> to vector<8x16xbf16>
    %c0_1 = arith.constant 0 : index
    %c0_2 = arith.constant 0 : index
    %2 = vector.load %arg3[%c0_1, %c0_2] : memref<16x128xbf16, #tpu.memory_space<vmem>>, vector<16x128xbf16>
    %cst = arith.constant dense<0.000000e+00> : vector<8x128xf32>
    %3 = tpu.matmul %1, %2, %cst {dimension_numbers = #tpu.dot_dimension_numbers<[1], [0], [0], [1], [0, 0, 1, 1], [], []>} : vector<8x16xbf16>, vector<16x128xbf16>, vector<8x128xf32> -> vector<8x128xf32>
    %c0_3 = arith.constant 0 : index
    %c0_4 = arith.constant 0 : index
    %4 = vector.load %arg4[%c0_3, %c0_4] : memref<1x128xf32, #tpu.memory_space<vmem>>, vector<1x128xf32>
    %5 = vector.broadcast %4 : vector<1x128xf32> to vector<8x128xf32>
    %6 = arith.addf %3, %5 : vector<8x128xf32>
    %7 = math.tanh %6 : vector<8x128xf32>
    %8 = arith.truncf %7 : vector<8x128xf32> to vector<8x128xbf16>
    %c0_5 = arith.constant 0 : index
    %c0_6 = arith.constant 0 : index
    %9 = vector.load %arg5[%c0_5, %c0_6] : memref<128x128xbf16, #tpu.memory_space<vmem>>, vector<128x128xbf16>
    %cst_7 = arith.constant dense<0.000000e+00> : vector<8x128xf32>
    %10 = tpu.matmul %8, %9, %cst_7 {dimension_numbers = #tpu.dot_dimension_numbers<[1], [0], [0], [1], [0, 0, 1, 1], [], []>} : vector<8x128xbf16>, vector<128x128xbf16>, vector<8x128xf32> -> vector<8x128xf32>
    %c0_8 = arith.constant 0 : index
    %c0_9 = arith.constant 0 : index
    %11 = vector.load %arg6[%c0_8, %c0_9] : memref<1x128xf32, #tpu.memory_space<vmem>>, vector<1x128xf32>
    %12 = vector.broadcast %11 : vector<1x128xf32> to vector<8x128xf32>
    %13 = arith.addf %10, %12 : vector<8x128xf32>
    %c0_10 = arith.constant 0 : index
    %c0_11 = arith.constant 0 : index
    %14 = vector.load %arg7[%c0_10, %c0_11] : memref<8x128xf32, #tpu.memory_space<vmem>>, vector<8x128xf32>
    tpu.vector_store %arg7[%c0_10, %c0_11], %13 {strides = array<i32>} : memref<8x128xf32, #tpu.memory_space<vmem>>, vector<8x128xf32>,
    return
  }
  func.func @transform_0(%arg0: i32, %arg1: i32) -> (i32, i32) {
    %c0_i32 = arith.constant 0 : i32
    %c0_i32_0 = arith.constant 0 : i32
    return %arg0, %c0_i32 : i32, i32
  }
  func.func @transform_1(%arg0: i32, %arg1: i32) -> (i32, i32) {
    %c0_i32 = arith.constant 0 : i32
    %c0_i32_0 = arith.constant 0 : i32
    %c0_i32_1 = arith.constant 0 : i32
    return %c0_i32, %c0_i32_0 : i32, i32
  }
  func.func @transform_2(%arg0: i32, %arg1: i32) -> (i32, i32) {
    %c0_i32 = arith.constant 0 : i32
    %c0_i32_0 = arith.constant 0 : i32
    %c0_i32_1 = arith.constant 0 : i32
    return %c0_i32, %c0_i32_0 : i32, i32
  }
  func.func @transform_3(%arg0: i32, %arg1: i32) -> (i32, i32) {
    %c0_i32 = arith.constant 0 : i32
    %c0_i32_0 = arith.constant 0 : i32
    return %c0_i32, %arg1 : i32, i32
  }
  func.func @transform_4(%arg0: i32, %arg1: i32) -> (i32, i32) {
    %c0_i32 = arith.constant 0 : i32
    %c0_i32_0 = arith.constant 0 : i32
    return %c0_i32, %arg1 : i32, i32
  }
  func.func @transform_5(%arg0: i32, %arg1: i32) -> (i32, i32) {
    %c0_i32 = arith.constant 0 : i32
    return %arg0, %arg1 : i32, i32
  }
}

module attributes {stable_mosaic.version = 11 : i64} {
  func.func @_compound_decoder_kernel(%arg0: i32, %arg1: i32, %arg2: memref<8x16xf32, #tpu.memory_space<vmem>>, %arg3: memref<16x128xbf16, #tpu.memory_space<vmem>>, %arg4: memref<1x128xf32, #tpu.memory_space<vmem>>, %arg5: memref<128x128xbf16, #tpu.memory_space<vmem>>, %arg6: memref<1x128xf32, #tpu.memory_space<vmem>>, %arg7: memref<8x128xf32, #tpu.memory_space<vmem>>) attributes {dimension_semantics = [#tpu.dimension_semantics<parallel>, #tpu.dimension_semantics<parallel>], iteration_bounds = array<i64: 1, 1>, scalar_prefetch = 0 : i64, scratch_operands = 0 : i64, tpu.core_type = #tpu.core_type<tc>, window_params = [{transform_indices = @transform_0, window_bounds = array<i64: 8, 16>}, {pipeline_mode = #tpu.pipeline_mode<synchronous>, transform_indices = @transform_1, window_bounds = array<i64: 16, 128>}, {pipeline_mode = #tpu.pipeline_mode<synchronous>, transform_indices = @transform_2, window_bounds = array<i64: 1, 128>}, {transform_indices = @transform_3, window_bounds = array<i64: 128, 128>}, {transform_indices = @transform_4, window_bounds = array<i64: 1, 128>}, {transform_indices = @transform_5, window_bounds = array<i64: 8, 128>}]} {
    %c0 = arith.constant 0 : index
    %c0_0 = arith.constant 0 : index
    %0 = vector.load %arg2[%c0, %c0_0] : memref<8x16xf32, #tpu.memory_space<vmem>>, vector<8x16xf32>
    %1 = arith.truncf %0 : vector<8x16xf32> to vector<8x16xbf16>
    %c0_1 = arith.constant 0 : index
    %c0_2 = arith.constant 0 : index
    %2 = vector.load %arg3[%c0_1, %c0_2] : memref<16x128xbf16, #tpu.memory_space<vmem>>, vector<16x128xbf16>
    %cst = arith.constant dense<0.000000e+00> : vector<8x128xf32>
    %3 = tpu.matmul %1, %2, %cst {dimension_numbers = #tpu.dot_dimension_numbers<[1], [0], [0], [1], [0, 0, 1, 1], [], []>} : vector<8x16xbf16>, vector<16x128xbf16>, vector<8x128xf32> -> vector<8x128xf32>
    %c0_3 = arith.constant 0 : index
    %c0_4 = arith.constant 0 : index
    %4 = vector.load %arg4[%c0_3, %c0_4] : memref<1x128xf32, #tpu.memory_space<vmem>>, vector<1x128xf32>
    %5 = vector.broadcast %4 : vector<1x128xf32> to vector<8x128xf32>
    %6 = arith.addf %3, %5 : vector<8x128xf32>
    %7 = math.tanh %6 : vector<8x128xf32>
    %8 = arith.truncf %7 : vector<8x128xf32> to vector<8x128xbf16>
    %c0_5 = arith.constant 0 : index
    %c0_6 = arith.constant 0 : index
    %9 = vector.load %arg5[%c0_5, %c0_6] : memref<128x128xbf16, #tpu.memory_space<vmem>>, vector<128x128xbf16>
    %cst_7 = arith.constant dense<0.000000e+00> : vector<8x128xf32>
    %10 = tpu.matmul %8, %9, %cst_7 {dimension_numbers = #tpu.dot_dimension_numbers<[1], [0], [0], [1], [0, 0, 1, 1], [], []>} : vector<8x128xbf16>, vector<128x128xbf16>, vector<8x128xf32> -> vector<8x128xf32>
    %c0_8 = arith.constant 0 : index
    %c0_9 = arith.constant 0 : index
    %11 = vector.load %arg6[%c0_8, %c0_9] : memref<1x128xf32, #tpu.memory_space<vmem>>, vector<1x128xf32>
    %12 = vector.broadcast %11 : vector<1x128xf32> to vector<8x128xf32>
    %13 = arith.addf %10, %12 : vector<8x128xf32>
    %c0_10 = arith.constant 0 : index
    %c0_11 = arith.constant 0 : index
    %14 = vector.load %arg7[%c0_10, %c0_11] : memref<8x128xf32, #tpu.memory_space<vmem>>, vector<8x128xf32>
    tpu.vector_store %arg7[%c0_10, %c0_11], %13 {strides = array<i32>} : memref<8x128xf32, #tpu.memory_space<vmem>>, vector<8x128xf32>,
    return
  }
  func.func @transform_0(%arg0: i32, %arg1: i32) -> (i32, i32) {
    %c0_i32 = arith.constant 0 : i32
    %c0_i32_0 = arith.constant 0 : i32
    return %arg0, %c0_i32 : i32, i32
  }
  func.func @transform_1(%arg0: i32, %arg1: i32) -> (i32, i32) {
    %c0_i32 = arith.constant 0 : i32
    %c0_i32_0 = arith.constant 0 : i32
    %c0_i32_1 = arith.constant 0 : i32
    return %c0_i32, %c0_i32_0 : i32, i32
  }
  func.func @transform_2(%arg0: i32, %arg1: i32) -> (i32, i32) {
    %c0_i32 = arith.constant 0 : i32
    %c0_i32_0 = arith.constant 0 : i32
    %c0_i32_1 = arith.constant 0 : i32
    return %c0_i32, %c0_i32_0 : i32, i32
  }
  func.func @transform_3(%arg0: i32, %arg1: i32) -> (i32, i32) {
    %c0_i32 = arith.constant 0 : i32
    %c0_i32_0 = arith.constant 0 : i32
    return %c0_i32, %arg1 : i32, i32
  }
  func.func @transform_4(%arg0: i32, %arg1: i32) -> (i32, i32) {
    %c0_i32 = arith.constant 0 : i32
    %c0_i32_0 = arith.constant 0 : i32
    return %c0_i32, %arg1 : i32, i32
  }
  func.func @transform_5(%arg0: i32, %arg1: i32) -> (i32, i32) {
    %c0_i32 = arith.constant 0 : i32
    return %arg0, %arg1 : i32, i32
  }
}

</mosaic_0001>

<llo_original>
// kernel: _forward.1
$region0: #{_forward.1}
  #allocation0 [shape = 'u32[]', space=smem, size = 0x4, offset = 0x4, fixed_abs, tag = 'smem constant byte address 0x4 - core index']
  #allocation1 [shape = 'u32[72,128]{1,0:T(1,128)}', space=vmem, size = 0x9000, scoped, tag = 'internal scratch']
  %s0 = inlined_call_operand.vmem [shape: f32[8,16], index: 0, kind: input, shape index: {}]
  %s1 = inlined_call_operand.vmem [shape: bf16[16,128], index: 1, kind: input, shape index: {}]
  %s2 = inlined_call_operand.vmem [shape: f32[1,128], index: 2, kind: input, shape index: {}]
  %s3 = inlined_call_operand.hbm [shape: bf16[128,128], index: 3, kind: input, shape index: {}]
  %s4 = inlined_call_operand.vmem [shape: f32[1,128], index: 4, kind: input, shape index: {}]
  %s5 = inlined_call_operand.vmem [shape: f32[8,128], index: 5, kind: output, shape index: {}]
  %s6 = sld [smem:[#allocation0]]
  $region34: #{_forward.1} parent=0
    _
  %s8 = ssub.s32 1, %s6
  %s9 = scalar_select 0, %s8, %s6
  $region1: #{_forward.1} parent=0
    #allocation2 [shape = 'u8[32768]{0}', space=vmem, size = 0x8000, scoped, tag = 'input window, operand 3, single buffered']
    #allocation3 [shape = 's32[1]{0}', space=sflag, size = 0x4, scoped, tag = 'scoped memory for _forward.1']
    %10 = vsyncpa [#allocation3], 0
    // Predicated region
    $region2: #{_forward.1} parent=1 // pred_check
      _
    $region3: #{_forward.1} parent=1 // pred_check_branch
      %12 = sbr.rel (0) target = $region5
    $region4: #{_forward.1} parent=1 // pred_region
      _
    $region5: #{_forward.1} parent=1 // pred_fallthru
      _
    // Predicated region
    $region6: #{_forward.1} parent=1 // pred_check
      _
    $region7: #{_forward.1} parent=1 // pred_check_branch
      %14 = sbr.rel (0) target = $region9
    $region8: #{_forward.1} parent=1 // pred_region
      _
    $region9: #{_forward.1} parent=1 // pred_fallthru
      _
    // Predicated region
    $region10: #{_forward.1} parent=1 // pred_check
      _
    $region11: #{_forward.1} parent=1 // pred_check_branch
      %16 = sbr.rel (0) target = $region13
    $region12: #{_forward.1} parent=1 // pred_region
      _
    $region13: #{_forward.1} parent=1 // pred_fallthru
      _
    // Predicated region
    $region14: #{_forward.1} parent=1 // pred_check
      _
    $region15: #{_forward.1} parent=1 // pred_check_branch
      %18 = sbr.rel (0) target = $region17
    $region16: #{_forward.1} parent=1 // pred_region
      %20 = vsyncadd [#allocation3], 0
      %s21 = sshll.u32 %s3, 4
      %s22 = int_to_ptr.hbm [resolvable:$true] %s21
      %s23 = sshll.u32 [#allocation2], 4
      %s24 = int_to_ptr.vmem [resolvable:$true] %s23
      %29 = dma.hbm_to_vmem [thread:$0]  %s22, 1024, %s24, [#allocation3], 64, 64, 4
    $region17: #{_forward.1} parent=1 // pred_fallthru
      _
    // Predicated region
    $region18: #{_forward.1} parent=1 // pred_check
      _
    $region19: #{_forward.1} parent=1 // pred_check_branch
      %31 = sbr.rel (0) target = $region21
    $region20: #{_forward.1} parent=1 // pred_region
      _
    $region21: #{_forward.1} parent=1 // pred_fallthru
      _
    // Predicated region
    $region22: #{_forward.1} parent=1 // pred_check
      _
    $region23: #{_forward.1} parent=1 // pred_check_branch
      %33 = sbr.rel (0) target = $region25
    $region24: #{_forward.1} parent=1 // pred_region
      %35 = dma.done [#allocation3], 1024
    $region25: #{_forward.1} parent=1 // pred_fallthru
      _
    %v37 = vld [vmem:[%s0] sm:$0xff]
    %v38 = vpack.c.bf16 %v37, %v37
    %v39 = vld [vmem:[%s1] sm:$0xf]
    %v40 = vld [vmem:[%s1 + $0x4] sm:$0xf]
    %v41 = vld [vmem:[%s2] sm:$0x1]
    %v43 = vperm.slane %v41, 0
    %v47 = vunpack.c.l.b16 %v39
    %v48 = vunpack.c.l.b16 %v40
    %v49 = vpack.c.b16 %v48, %v47
    %vm51 = vcmask 130048
    %v53 = vsel %vm51, %v38, 0
    %55 = vmatpush.bf16.msra.mxu0 0
    %56 = vmatpush.bf16.msra.mxu0 0
    %57 = vmatpush.bf16.msra.mxu0 0
    %58 = vmatpush.bf16.msra.mxu0 0
    %59 = vmatpush.bf16.msra.mxu0 0
    %60 = vmatpush.bf16.msra.mxu0 0
    %61 = vmatpush.bf16.msra.mxu0 0
    %62 = vmatpush.bf16.msra.mxu0 %v49
    %63 = vmatmul.bf16.gmra.mxu0 %v53
    %v64 = vpop.f32.mrf.mxu0
    %v65 = vadd.f32 %v43, %v64
    %v66 = vpop.f32.mrf.mxu0
    %67 = vdwg.mxu0
    %v68 = vtanh.pop %v65
    %v69 = vpack.c.bf16 %v68, %v68
    %v70 = vld [vmem:[#allocation2] sm:$0xf]
    %v71 = vld [vmem:[#allocation2 + $0x4] sm:$0xf]
    %v72 = vld [vmem:[#allocation2 + $0x8] sm:$0xf]
    %v73 = vld [vmem:[#allocation2 + $0xc] sm:$0xf]
    %v74 = vld [vmem:[#allocation2 + $0x10] sm:$0xf]
    %v75 = vld [vmem:[#allocation2 + $0x14] sm:$0xf]
    %v76 = vld [vmem:[#allocation2 + $0x18] sm:$0xf]
    %v77 = vld [vmem:[#allocation2 + $0x1c] sm:$0xf]
    %v78 = vld [vmem:[#allocation2 + $0x20] sm:$0xf]
    %v79 = vld [vmem:[#allocation2 + $0x24] sm:$0xf]
    %v80 = vld [vmem:[#allocation2 + $0x28] sm:$0xf]
    %v81 = vld [vmem:[#allocation2 + $0x2c] sm:$0xf]
    %v82 = vld [vmem:[#allocation2 + $0x30] sm:$0xf]
    %v83 = vld [vmem:[#allocation2 + $0x34] sm:$0xf]
    %v84 = vld [vmem:[#allocation2 + $0x38] sm:$0xf]
    %v85 = vld [vmem:[#allocation2 + $0x3c] sm:$0xf]
    %v86 = vld [vmem:[%s4] sm:$0x1]
    %v88 = vperm.slane %v86, 0
    %v106 = vunpack.c.l.b16 %v70
    %v107 = vunpack.c.l.b16 %v71
    %v108 = vunpack.c.l.b16 %v72
    %v109 = vunpack.c.l.b16 %v73
    %v110 = vunpack.c.l.b16 %v74
    %v111 = vunpack.c.l.b16 %v75
    %v112 = vunpack.c.l.b16 %v76
    %v113 = vunpack.c.l.b16 %v77
    %v114 = vunpack.c.l.b16 %v78
    %v115 = vunpack.c.l.b16 %v79
    %v116 = vunpack.c.l.b16 %v80
    %v117 = vunpack.c.l.b16 %v81
    %v118 = vunpack.c.l.b16 %v82
    %v119 = vunpack.c.l.b16 %v83
    %v120 = vunpack.c.l.b16 %v84
    %v121 = vunpack.c.l.b16 %v85
    %v122 = vpack.c.b16 %v107, %v106
    %v123 = vpack.c.b16 %v109, %v108
    %v124 = vpack.c.b16 %v111, %v110
    %v125 = vpack.c.b16 %v113, %v112
    %v126 = vpack.c.b16 %v115, %v114
    %v127 = vpack.c.b16 %v117, %v116
    %v128 = vpack.c.b16 %v119, %v118
    %v129 = vpack.c.b16 %v121, %v120
    %138 = vmatpush.bf16.msra.mxu0 %v129
    %139 = vmatpush.bf16.msra.mxu0 %v128
    %140 = vmatpush.bf16.msra.mxu0 %v127
    %141 = vmatpush.bf16.msra.mxu0 %v126
    %142 = vmatpush.bf16.msra.mxu0 %v125
    %143 = vmatpush.bf16.msra.mxu0 %v124
    %144 = vmatpush.bf16.msra.mxu0 %v123
    %145 = vmatpush.bf16.msra.mxu0 %v122
    %146 = vmatmul.bf16.gmra.mxu0 %v69
    %v147 = vpop.f32.mrf.mxu0
    %v148 = vadd.f32 %v88, %v147
    %v149 = vpop.f32.mrf.mxu0
    %150 = vdwg.mxu0
    %151 = vst [vmem:[%s5] sm:$0xff] %v148
    // Predicated region
    $region26: #{_forward.1} parent=1 // pred_check
      _
    $region27: #{_forward.1} parent=1 // pred_check_branch
      %153 = sbr.rel (0) target = $region29
    $region28: #{_forward.1} parent=1 // pred_region
      _
    $region29: #{_forward.1} parent=1 // pred_fallthru
      _
    // Predicated region
    $region30: #{_forward.1} parent=1 // pred_check
      _
    $region31: #{_forward.1} parent=1 // pred_check_branch
      %155 = sbr.rel (0) target = $region33
    $region32: #{_forward.1} parent=1 // pred_region
      _
    $region33: #{_forward.1} parent=1 // pred_fallthru
      _
    %156 = vsyncpa [#allocation3], 1

// kernel: _forward.1
$region0: #{_forward.1}
  #allocation0 [shape = 'u32[]', space=smem, size = 0x4, offset = 0x4, fixed_abs, tag = 'smem constant byte address 0x4 - core index']
  #allocation1 [shape = 'u32[72,128]{1,0:T(1,128)}', space=vmem, size = 0x9000, scoped, tag = 'internal scratch']
  %s0 = inlined_call_operand.vmem [shape: f32[8,16], index: 0, kind: input, shape index: {}]
  %s1 = inlined_call_operand.vmem [shape: bf16[16,128], index: 1, kind: input, shape index: {}]
  %s2 = inlined_call_operand.vmem [shape: f32[1,128], index: 2, kind: input, shape index: {}]
  %s3 = inlined_call_operand.hbm [shape: bf16[128,128], index: 3, kind: input, shape index: {}]
  %s4 = inlined_call_operand.vmem [shape: f32[1,128], index: 4, kind: input, shape index: {}]
  %s5 = inlined_call_operand.vmem [shape: f32[8,128], index: 5, kind: output, shape index: {}]
  %s6 = sld [smem:[#allocation0]]
  $region34: #{_forward.1} parent=0
    _
  %s8 = ssub.s32 1, %s6
  %s9 = scalar_select 0, %s8, %s6
  $region1: #{_forward.1} parent=0
    #allocation2 [shape = 'u8[32768]{0}', space=vmem, size = 0x8000, scoped, tag = 'input window, operand 3, single buffered']
    #allocation3 [shape = 's32[1]{0}', space=sflag, size = 0x4, scoped, tag = 'scoped memory for _forward.1']
    %10 = vsyncpa [#allocation3], 0
    // Predicated region
    $region2: #{_forward.1} parent=1 // pred_check
      _
    $region3: #{_forward.1} parent=1 // pred_check_branch
      %12 = sbr.rel (0) target = $region5
    $region4: #{_forward.1} parent=1 // pred_region
      _
    $region5: #{_forward.1} parent=1 // pred_fallthru
      _
    // Predicated region
    $region6: #{_forward.1} parent=1 // pred_check
      _
    $region7: #{_forward.1} parent=1 // pred_check_branch
      %14 = sbr.rel (0) target = $region9
    $region8: #{_forward.1} parent=1 // pred_region
      _
    $region9: #{_forward.1} parent=1 // pred_fallthru
      _
    // Predicated region
    $region10: #{_forward.1} parent=1 // pred_check
      _
    $region11: #{_forward.1} parent=1 // pred_check_branch
      %16 = sbr.rel (0) target = $region13
    $region12: #{_forward.1} parent=1 // pred_region
      _
    $region13: #{_forward.1} parent=1 // pred_fallthru
      _
    // Predicated region
    $region14: #{_forward.1} parent=1 // pred_check
      _
    $region15: #{_forward.1} parent=1 // pred_check_branch
      %18 = sbr.rel (0) target = $region17
    $region16: #{_forward.1} parent=1 // pred_region
      %20 = vsyncadd [#allocation3], 0
      %s21 = sshll.u32 %s3, 4
      %s22 = int_to_ptr.hbm [resolvable:$true] %s21
      %s23 = sshll.u32 [#allocation2], 4
      %s24 = int_to_ptr.vmem [resolvable:$true] %s23
      %29 = dma.hbm_to_vmem [thread:$0]  %s22, 1024, %s24, [#allocation3], 64, 64, 4
    $region17: #{_forward.1} parent=1 // pred_fallthru
      _
    // Predicated region
    $region18: #{_forward.1} parent=1 // pred_check
      _
    $region19: #{_forward.1} parent=1 // pred_check_branch
      %31 = sbr.rel (0) target = $region21
    $region20: #{_forward.1} parent=1 // pred_region
      _
    $region21: #{_forward.1} parent=1 // pred_fallthru
      _
    // Predicated region
    $region22: #{_forward.1} parent=1 // pred_check
      _
    $region23: #{_forward.1} parent=1 // pred_check_branch
      %33 = sbr.rel (0) target = $region25
    $region24: #{_forward.1} parent=1 // pred_region
      %35 = dma.done [#allocation3], 1024
    $region25: #{_forward.1} parent=1 // pred_fallthru
      _
    %v37 = vld [vmem:[%s0] sm:$0xff]
    %v38 = vpack.c.bf16 %v37, %v37
    %v39 = vld [vmem:[%s1] sm:$0xf]
    %v40 = vld [vmem:[%s1 + $0x4] sm:$0xf]
    %v41 = vld [vmem:[%s2] sm:$0x1]
    %v43 = vperm.slane %v41, 0
    %v47 = vunpack.c.l.b16 %v39
    %v48 = vunpack.c.l.b16 %v40
    %v49 = vpack.c.b16 %v48, %v47
    %vm51 = vcmask 130048
    %v53 = vsel %vm51, %v38, 0
    %55 = vmatpush.bf16.msra.mxu0 0
    %56 = vmatpush.bf16.msra.mxu0 0
    %57 = vmatpush.bf16.msra.mxu0 0
    %58 = vmatpush.bf16.msra.mxu0 0
    %59 = vmatpush.bf16.msra.mxu0 0
    %60 = vmatpush.bf16.msra.mxu0 0
    %61 = vmatpush.bf16.msra.mxu0 0
    %62 = vmatpush.bf16.msra.mxu0 %v49
    %63 = vmatmul.bf16.gmra.mxu0 %v53
    %v64 = vpop.f32.mrf.mxu0
    %v65 = vadd.f32 %v43, %v64
    %v66 = vpop.f32.mrf.mxu0
    %67 = vdwg.mxu0
    %v68 = vtanh.pop %v65
    %v69 = vpack.c.bf16 %v68, %v68
    %v70 = vld [vmem:[#allocation2] sm:$0xf]
    %v71 = vld [vmem:[#allocation2 + $0x4] sm:$0xf]
    %v72 = vld [vmem:[#allocation2 + $0x8] sm:$0xf]
    %v73 = vld [vmem:[#allocation2 + $0xc] sm:$0xf]
    %v74 = vld [vmem:[#allocation2 + $0x10] sm:$0xf]
    %v75 = vld [vmem:[#allocation2 + $0x14] sm:$0xf]
    %v76 = vld [vmem:[#allocation2 + $0x18] sm:$0xf]
    %v77 = vld [vmem:[#allocation2 + $0x1c] sm:$0xf]
    %v78 = vld [vmem:[#allocation2 + $0x20] sm:$0xf]
    %v79 = vld [vmem:[#allocation2 + $0x24] sm:$0xf]
    %v80 = vld [vmem:[#allocation2 + $0x28] sm:$0xf]
    %v81 = vld [vmem:[#allocation2 + $0x2c] sm:$0xf]
    %v82 = vld [vmem:[#allocation2 + $0x30] sm:$0xf]
    %v83 = vld [vmem:[#allocation2 + $0x34] sm:$0xf]
    %v84 = vld [vmem:[#allocation2 + $0x38] sm:$0xf]
    %v85 = vld [vmem:[#allocation2 + $0x3c] sm:$0xf]
    %v86 = vld [vmem:[%s4] sm:$0x1]
    %v88 = vperm.slane %v86, 0
    %v106 = vunpack.c.l.b16 %v70
    %v107 = vunpack.c.l.b16 %v71
    %v108 = vunpack.c.l.b16 %v72
    %v109 = vunpack.c.l.b16 %v73
    %v110 = vunpack.c.l.b16 %v74
    %v111 = vunpack.c.l.b16 %v75
    %v112 = vunpack.c.l.b16 %v76
    %v113 = vunpack.c.l.b16 %v77
    %v114 = vunpack.c.l.b16 %v78
    %v115 = vunpack.c.l.b16 %v79
    %v116 = vunpack.c.l.b16 %v80
    %v117 = vunpack.c.l.b16 %v81
    %v118 = vunpack.c.l.b16 %v82
    %v119 = vunpack.c.l.b16 %v83
    %v120 = vunpack.c.l.b16 %v84
    %v121 = vunpack.c.l.b16 %v85
    %v122 = vpack.c.b16 %v107, %v106
    %v123 = vpack.c.b16 %v109, %v108
    %v124 = vpack.c.b16 %v111, %v110
    %v125 = vpack.c.b16 %v113, %v112
    %v126 = vpack.c.b16 %v115, %v114
    %v127 = vpack.c.b16 %v117, %v116
    %v128 = vpack.c.b16 %v119, %v118
    %v129 = vpack.c.b16 %v121, %v120
    %138 = vmatpush.bf16.msra.mxu0 %v129
    %139 = vmatpush.bf16.msra.mxu0 %v128
    %140 = vmatpush.bf16.msra.mxu0 %v127
    %141 = vmatpush.bf16.msra.mxu0 %v126
    %142 = vmatpush.bf16.msra.mxu0 %v125
    %143 = vmatpush.bf16.msra.mxu0 %v124
    %144 = vmatpush.bf16.msra.mxu0 %v123
    %145 = vmatpush.bf16.msra.mxu0 %v122
    %146 = vmatmul.bf16.gmra.mxu0 %v69
    %v147 = vpop.f32.mrf.mxu0
    %v148 = vadd.f32 %v88, %v147
    %v149 = vpop.f32.mrf.mxu0
    %150 = vdwg.mxu0
    %151 = vst [vmem:[%s5] sm:$0xff] %v148
    // Predicated region
    $region26: #{_forward.1} parent=1 // pred_check
      _
    $region27: #{_forward.1} parent=1 // pred_check_branch
      %153 = sbr.rel (0) target = $region29
    $region28: #{_forward.1} parent=1 // pred_region
      _
    $region29: #{_forward.1} parent=1 // pred_fallthru
      _
    // Predicated region
    $region30: #{_forward.1} parent=1 // pred_check
      _
    $region31: #{_forward.1} parent=1 // pred_check_branch
      %155 = sbr.rel (0) target = $region33
    $region32: #{_forward.1} parent=1 // pred_region
      _
    $region33: #{_forward.1} parent=1 // pred_fallthru
      _
    %156 = vsyncpa [#allocation3], 1

</llo_original>
